<compile_context>
chip_gen: v7x
topology: tpu7x:2x2x1
jax: 0.10.0
libtpu: 0.0.40
codegen_flags: <defaults>
</compile_context>

<pallas_src>
import functools

import jax
import jax.numpy as jnp
from jax import lax
from jax.experimental import pallas as pl
from jax.experimental.pallas import tpu as pltpu


def _round_up(x, m):
    return (x + m - 1) // m * m


# ---------------------------------------------------------------------------
# Pass 1: conv tile -> per-tile partial (sum, sum of squares) per channel.
# ---------------------------------------------------------------------------
def _conv_stats_kernel(x_ref, w_ref, stat_ref, *, l_total, tile_l):
    t = pl.program_id(0)
    # Single deep MXU matmul per tile: (C_out, K*C_in) @ (K*C_in, TILE_L), f32 acc.
    conv = jnp.dot(w_ref[...], x_ref[...], preferred_element_type=jnp.float32)
    # Mask columns padded past the true N*L_out extent so global stats stay exact.
    valid = l_total - t * tile_l
    lane = lax.broadcasted_iota(jnp.int32, conv.shape, 1)
    m = (lane < valid).astype(jnp.float32)
    cm = conv * m
    s = jnp.sum(cm, axis=1, keepdims=True)            # (C_out, 1)
    ss = jnp.sum(cm * conv, axis=1, keepdims=True)    # (C_out, 1)
    stat_ref[0, :, :] = jnp.concatenate([s, ss], axis=1)   # (C_out, 2)


# ---------------------------------------------------------------------------
# Pass 2: recompute conv tile, fused BN (precomputed scale/shift) + ReLU, store.
# ---------------------------------------------------------------------------
def _conv_norm_relu_kernel(x_ref, w_ref, p_ref, o_ref):
    conv = jnp.dot(w_ref[...], x_ref[...], preferred_element_type=jnp.float32)
    y = conv * p_ref[:, 0:1] + p_ref[:, 1:2]          # BN folded into one scale+shift
    o_ref[...] = jnp.maximum(y, 0.0).astype(o_ref.dtype)   # ReLU, lane-dense store


def strided_conv1d_block(x_ncl, weight, bias, gamma, beta, *, stride, eps=1e-3,
                         tile_l=512, use_bf16_matmul=True, out_dtype=jnp.float32):
    """x_ncl: (N, C_in, L); weight: (C_out, C_in, K) like torch.nn.Conv1d.
    Returns (N, C_out, L_out) matching StridedConv1DBlock.forward (train-mode BN)."""
    n, c_in, l = x_ncl.shape
    c_out, c_in_w, k = weight.shape
    assert c_in_w == c_in
    l_out = (l - k) // stride + 1
    assert l_out > 0
    kc = k * c_in
    l_total = n * l_out

    # Lane tiles: 128-aligned, default 512-wide, never wider than the padded extent.
    tile_l = max(128, _round_up(min(tile_l, _round_up(l_total, 128)), 128))
    l_total_pad = _round_up(l_total, tile_l)
    n_tiles = l_total_pad // tile_l

    x = x_ncl.astype(jnp.float32)
    # im2col with the batch folded into the lane axis (single end-pad):
    #   x_col[kk*C_in + c, b*L_out + j] = x[b, c, j*stride + kk]
    cols = [x[:, :, kk: kk + (l_out - 1) * stride + 1: stride] for kk in range(k)]
    x_col = jnp.concatenate(cols, axis=1)                                  # (N, K*C_in, L_out)
    x_col = jnp.transpose(x_col, (1, 0, 2)).reshape(kc, l_total)           # (K*C_in, N*L_out)
    x_col = jnp.pad(x_col, ((0, 0), (0, l_total_pad - l_total)))

    # Flatten weight with the matching k-major channel order: w_flat[o, kk*C_in + c] = w[o, c, kk]
    w_flat = jnp.transpose(weight, (0, 2, 1)).reshape(c_out, kc).astype(jnp.float32)

    # bf16 MXU operands (f32 accumulation) by default on all generations; BN/ReLU stays f32.
    mm_dtype = jnp.bfloat16 if use_bf16_matmul else jnp.float32
    x_col = x_col.astype(mm_dtype)
    w_flat = w_flat.astype(mm_dtype)
    itemsize = jnp.dtype(mm_dtype).itemsize

    # Conv bias is exactly absorbed by train-mode BatchNorm (mean shifts by `bias`,
    # variance unchanged), so it never enters the kernel.
    del bias

    # ---------------- Pass 1: global batch statistics -----------------------
    stats_kern = functools.partial(_conv_stats_kernel, l_total=l_total, tile_l=tile_l)
    cost1 = pl.CostEstimate(
        flops=2 * c_out * kc * l_total_pad + 4 * c_out * l_total_pad,
        transcendentals=0,
        bytes_accessed=x_col.size * itemsize + w_flat.size * itemsize
                       + n_tiles * c_out * 2 * 4)

    part_stats = pl.pallas_call(
        stats_kern,
        out_shape=jax.ShapeDtypeStruct((n_tiles, c_out, 2), jnp.float32),
        grid_spec=pltpu.PrefetchScalarGridSpec(
            num_scalar_prefetch=0,
            grid=(n_tiles,),
            in_specs=[
                pl.BlockSpec((kc, tile_l), lambda t: (0, t)),   # im2col tile (streamed)
                pl.BlockSpec((c_out, kc), lambda t: (0, 0)),    # weights: VMEM-resident
            ],
            out_specs=pl.BlockSpec((1, c_out, 2), lambda t: (t, 0, 0)),
        ),
        compiler_params=pltpu.CompilerParams(dimension_semantics=("parallel",)),
        cost_estimate=cost1,
    )(x_col, w_flat)

    # Tiny XLA finalization: global mean/var -> fused BN scale/shift.
    psum = jnp.sum(part_stats, axis=0)                # (C_out, 2)
    count = float(l_total)
    mean = psum[:, 0] / count
    # One-pass variance E[x^2]-E[x]^2 in f32; bias was dropped so |mean| stays small.
    var = jnp.maximum(psum[:, 1] / count - mean * mean, 0.0)
    scale = gamma.astype(jnp.float32) * lax.rsqrt(var + eps)
    shift = beta.astype(jnp.float32) - mean * scale
    params = jnp.stack([scale, shift], axis=1)        # (C_out, 2) single resident input

    # ---------------- Pass 2: normalize + ReLU ------------------------------
    out_itemsize = jnp.dtype(out_dtype).itemsize
    cost2 = pl.CostEstimate(
        flops=2 * c_out * kc * l_total_pad + 3 * c_out * l_total_pad,
        transcendentals=0,
        bytes_accessed=x_col.size * itemsize + w_flat.size * itemsize
                       + c_out * l_total_pad * out_itemsize)

    out2 = pl.pallas_call(
        _conv_norm_relu_kernel,
        out_shape=jax.ShapeDtypeStruct((c_out, l_total_pad), out_dtype),
        grid_spec=pltpu.PrefetchScalarGridSpec(
            num_scalar_prefetch=0,
            grid=(n_tiles,),
            in_specs=[
                pl.BlockSpec((kc, tile_l), lambda t: (0, t)),   # im2col tile (streamed)
                pl.BlockSpec((c_out, kc), lambda t: (0, 0)),    # weights: resident
                pl.BlockSpec((c_out, 2), lambda t: (0, 0)),     # packed (scale, shift)
            ],
            out_specs=pl.BlockSpec((c_out, tile_l), lambda t: (0, t)),
        ),
        compiler_params=pltpu.CompilerParams(dimension_semantics=("parallel",)),
        cost_estimate=cost2,
    )(x_col, w_flat, params)

    # Un-fold batch from the lane axis: (C_out, N*L_out) -> (N, C_out, L_out).
    y = out2[:, :l_total].reshape(c_out, n, l_out)
    # TODO(synk): BatchNorm1d running_mean/running_var buffer updates (training side
    # effect controlled by norm_momentum) are not returned; they do not affect forward().
    return jnp.transpose(y, (1, 0, 2))


if __name__ == "__main__":
    key = jax.random.PRNGKey(0)
    # Small shapes consistent with the module (long temporal 1D signal, few channels).
    N, C_IN, L = 2, 4, 1500
    C_OUT, K, STRIDE = 8, 6, 3
    EPS = 1e-3  # nn.BatchNorm1d(eps=0.001)

    k1, k2, k3, k4, k5 = jax.random.split(key, 5)
    x = jax.random.normal(k1, (N, C_IN, L), dtype=jnp.float32)
    w = 0.2 * jax.random.normal(k2, (C_OUT, C_IN, K), dtype=jnp.float32)
    b = 0.1 * jax.random.normal(k3, (C_OUT,), dtype=jnp.float32)
    gamma = 1.0 + 0.1 * jax.random.normal(k4, (C_OUT,), dtype=jnp.float32)
    beta = 0.1 * jax.random.normal(k5, (C_OUT,), dtype=jnp.float32)

    # Pure-JAX reference of the module forward (conv1d + bias + train-mode BN + ReLU).
    ref = lax.conv_general_dilated(
        x, w, window_strides=(STRIDE,), padding="VALID",
        dimension_numbers=("NCH", "OIH", "NCH"))
    ref = ref + b[None, :, None]
    mean = ref.mean(axis=(0, 2), keepdims=True)
    var = ((ref - mean) ** 2).mean(axis=(0, 2), keepdims=True)
    ref = (ref - mean) / jnp.sqrt(var + EPS)
    ref = jnp.maximum(ref * gamma[None, :, None] + beta[None, :, None], 0.0)

    L_OUT = (L - K) // STRIDE + 1  # 499 -> l_total=998 -> 2 tiles of 512 (multi-tile stats path)

    # f32 MXU operands: strict check against the f32 reference.
    out_f32 = jax.block_until_ready(
        strided_conv1d_block(x, w, b, gamma, beta, stride=STRIDE, eps=EPS,
                             use_bf16_matmul=False))
    assert out_f32.shape == (N, C_OUT, L_OUT), out_f32.shape
    err32 = float(jnp.max(jnp.abs(out_f32 - ref)))
    assert jnp.allclose(out_f32, ref, atol=1e-4, rtol=1e-4), err32

    # Default bf16-operand path (f32 accumulation): looser precision-mode tolerance.
    out_bf16 = jax.block_until_ready(
        strided_conv1d_block(x, w, b, gamma, beta, stride=STRIDE, eps=EPS))
    assert out_bf16.shape == (N, C_OUT, L_OUT), out_bf16.shape
    err16 = float(jnp.max(jnp.abs(out_bf16 - ref)))
    assert jnp.allclose(out_bf16, ref, atol=5e-2, rtol=5e-2), err16

    print("KERNEL_OK")
</pallas_src>

<mosaic_0001>
module attributes {stable_mosaic.version = 11 : i64} {
  func.func @_conv_stats_kernel(%arg0: i32, %arg1: memref<24x512xf32, #tpu.memory_space<vmem>>, %arg2: memref<8x24xf32, #tpu.memory_space<vmem>>, %arg3: memref<1x8x2xf32, #tpu.memory_space<vmem>>) attributes {dimension_semantics = [#tpu.dimension_semantics<parallel>], iteration_bounds = array<i64: 2>, scalar_prefetch = 0 : i64, scratch_operands = 0 : i64, tpu.core_type = #tpu.core_type<tc>, window_params = [{transform_indices = @transform_0, window_bounds = array<i64: 24, 512>}, {pipeline_mode = #tpu.pipeline_mode<synchronous>, transform_indices = @transform_1, window_bounds = array<i64: 8, 24>}, {transform_indices = @transform_2, window_bounds = array<i64: 1, 8, 2>}]} {
    %c0 = arith.constant 0 : index
    %c0_0 = arith.constant 0 : index
    %0 = vector.load %arg2[%c0, %c0_0] : memref<8x24xf32, #tpu.memory_space<vmem>>, vector<8x24xf32>
    %c0_1 = arith.constant 0 : index
    %c0_2 = arith.constant 0 : index
    %1 = vector.load %arg1[%c0_1, %c0_2] : memref<24x512xf32, #tpu.memory_space<vmem>>, vector<24x512xf32>
    %cst = arith.constant dense<0.000000e+00> : vector<8x512xf32>
    %2 = tpu.matmul %0, %1, %cst {dimension_numbers = #tpu.dot_dimension_numbers<[1], [0], [0], [1], [0, 0, 1, 1], [], []>} : vector<8x24xf32>, vector<24x512xf32>, vector<8x512xf32> -> vector<8x512xf32>
    %c512_i32 = arith.constant 512 : i32
    %3 = arith.muli %arg0, %c512_i32 : i32
    %c998_i32 = arith.constant 998 : i32
    %4 = arith.subi %c998_i32, %3 : i32
    %5 = tpu.iota {dimensions = array<i32: 1>} : vector<8x512xi32>
    %6 = vector.broadcast %4 : i32 to vector<8x512xi32>
    %7 = arith.cmpi slt, %5, %6 : vector<8x512xi32>
    %8 = arith.extui %7 : vector<8x512xi1> to vector<8x512xi32>
    %9 = arith.sitofp %8 : vector<8x512xi32> to vector<8x512xf32>
    %10 = arith.mulf %2, %9 : vector<8x512xf32>
    %cst_3 = arith.constant dense<0.000000e+00> : vector<8xf32>
    %11 = vector.multi_reduction <add>, %10, %cst_3 [1] : vector<8x512xf32> to vector<8xf32>
    %12 = vector.shape_cast %11 : vector<8xf32> to vector<8x1xf32>
    %13 = arith.mulf %10, %2 : vector<8x512xf32>
    %cst_4 = arith.constant dense<0.000000e+00> : vector<8xf32>
    %14 = vector.multi_reduction <add>, %13, %cst_4 [1] : vector<8x512xf32> to vector<8xf32>
    %15 = vector.shape_cast %14 : vector<8xf32> to vector<8x1xf32>
    %16 = tpu.concatenate %12, %15 in 1 : vector<8x1xf32>, vector<8x1xf32> -> vector<8x2xf32>
    %c0_5 = arith.constant 0 : index
    %c0_6 = arith.constant 0 : index
    %c0_7 = arith.constant 0 : index
    %17 = vector.load %arg3[%c0_5, %c0_6, %c0_7] : memref<1x8x2xf32, #tpu.memory_space<vmem>>, vector<1x8x2xf32>
    %18 = vector.shape_cast %17 : vector<1x8x2xf32> to vector<8x2xf32>
    %19 = vector.shape_cast %16 : vector<8x2xf32> to vector<1x8x2xf32>
    tpu.vector_store %arg3[%c0_5, %c0_6, %c0_7], %19 {strides = array<i32>} : memref<1x8x2xf32, #tpu.memory_space<vmem>>, vector<1x8x2xf32>,
    return
  }
  func.func @transform_0(%arg0: i32) -> (i32, i32) {
    %c0_i32 = arith.constant 0 : i32
    %c0_i32_0 = arith.constant 0 : i32
    return %c0_i32, %arg0 : i32, i32
  }
  func.func @transform_1(%arg0: i32) -> (i32, i32) {
    %c0_i32 = arith.constant 0 : i32
    %c0_i32_0 = arith.constant 0 : i32
    %c0_i32_1 = arith.constant 0 : i32
    return %c0_i32, %c0_i32_0 : i32, i32
  }
  func.func @transform_2(%arg0: i32) -> (i32, i32, i32) {
    %c0_i32 = arith.constant 0 : i32
    %c0_i32_0 = arith.constant 0 : i32
    %c0_i32_1 = arith.constant 0 : i32
    return %arg0, %c0_i32, %c0_i32_0 : i32, i32, i32
  }
}

</mosaic_0001>

<llo_original>
// kernel: tpu_custom_call.1
$region0: #{tpu_custom_call.1}
  #allocation0 [shape = 'u32[]', space=smem, size = 0x4, offset = 0x4, fixed_abs, tag = 'smem constant byte address 0x4 - core index']
  #allocation1 [shape = 'u32[144,128]{1,0:T(1,128)}', space=vmem, size = 0x12000, scoped, tag = 'internal scratch']
  %s0 = inlined_call_operand.hbm [shape: f32[24,1024], index: 0, kind: input, shape index: {}]
  %s1 = inlined_call_operand.hbm [shape: f32[8,24], index: 1, kind: input, shape index: {}]
  %s2 = inlined_call_operand.vmem [shape: f32[2,8,2], index: 2, kind: output, shape index: {}]
  %s3 = sld [smem:[#allocation0]]
  $region49: #{tpu_custom_call.1} parent=0
    _
  %s5 = ssub.s32 1, %s3
  %s6 = scalar_select 0, %s5, %s3
  $region1: #{tpu_custom_call.1} parent=0
    #allocation2 [shape = 'u8[98304]{0}', space=vmem, size = 0x18000, scoped, tag = 'input window, operand 0']
    #allocation3 [shape = 's32[2]{0}', space=sflag, size = 0x8, scoped, tag = 'scoped memory for tpu_custom_call.1']
    #allocation4 [shape = 'u8[4096]{0}', space=vmem, size = 0x1000, scoped, tag = 'input window, operand 1, single buffered']
    #allocation5 [shape = 's32[1]{0}', space=sflag, size = 0x4, scoped, tag = 'scoped memory for tpu_custom_call.1']
    %7 = vsyncpa [#allocation3], 0
    %s8 = scalar_lea.sflag [#allocation3], 1
    %9 = vsyncpa %s8, 0
    %10 = vsyncpa [#allocation5], 0
    loop: start=0, step=1, limit=4
    $region2: #{tpu_custom_call.1} parent=1 // loop_pre_header
      _
    $region3: #{tpu_custom_call.1} parent=1 // loop_header
      %s12 = sphi 0, %s16
      %p13 = scmp.ge.s32.totalorder %s12, 4
      %s22 = sphi 0, %s24
      %s25 = sphi 0, %s22
      %s26 = sphi 0, %s25
      %s42 = sphi 0, %s26
      %s46 = sphi 0, %s46
      %s48 = sphi 0, %s46
      %s49 = sphi 0, %s48
      %s63 = sphi 0, %s49
      %s69 = sphi 0, %s71
      %s72 = sphi 0, %s69
      %s73 = sphi 0, %s72
      %s89 = sphi 0, %s73
    $region4: #{tpu_custom_call.1} parent=1 // loop_header_branch
      %15 = sbr.rel (%p13) target = $region8
    $region5: #{tpu_custom_call.1} parent=1 // loop_body
      %s17 = ssub.s32 %s12, 1
      %s18 = ssub.s32 %s12, 2
      %s19 = sadd.s32 %s12, 1
      %s20 = ssub.s32 %s12, %s19
      %p21 = scmp.eq.s32.totalorder %s20, 0
      %s23 = sadd.s32 %s22, 1
      %s24 = scalar_select %p21, %s22, %s23
      %p27 = pneg %p21
      %p28 = scmp.eq.s32.totalorder %s12, 1
      %p29 = por %p27, %p28
      %p30 = scmp.ne.s32.totalorder %s22, %s25
      %p31 = scmp.eq.s32.totalorder %s12, 0
      %p32 = por %p30, %p31
      %p33 = scmp.ne.s32.totalorder %s22, %s25
      %p34 = scmp.eq.s32.totalorder %s17, 1
      %p35 = por %p33, %p34
      %p36 = scmp.ne.s32.totalorder %s25, %s26
      %p37 = scmp.eq.s32.totalorder %s17, 0
      %p38 = por %p36, %p37
      %p39 = scmp.ne.s32.totalorder %s25, %s26
      %p40 = scmp.eq.s32.totalorder %s18, 1
      %p41 = por %p39, %p40
      %p43 = scmp.ne.s32.totalorder %s26, %s42
      %p44 = scmp.eq.s32.totalorder %s18, 0
      %p45 = por %p43, %p44
      %s47 = sadd.s32 %s46, 1
      %p50 = scmp.eq.s32.totalorder %s12, 1
      %p51 = scmp.ne.s32.totalorder %s46, %s48
      %p52 = scmp.eq.s32.totalorder %s12, 0
      %p53 = por %p51, %p52
      %p54 = scmp.ne.s32.totalorder %s46, %s48
      %p55 = scmp.eq.s32.totalorder %s17, 1
      %p56 = por %p54, %p55
      %p57 = scmp.ne.s32.totalorder %s48, %s49
      %p58 = scmp.eq.s32.totalorder %s17, 0
      %p59 = por %p57, %p58
      %p60 = scmp.ne.s32.totalorder %s48, %s49
      %p61 = scmp.eq.s32.totalorder %s18, 1
      %p62 = por %p60, %p61
      %p64 = scmp.ne.s32.totalorder %s49, %s63
      %p65 = scmp.eq.s32.totalorder %s18, 0
      %p66 = por %p64, %p65
      %s67 = ssub.s32 %s12, %s19
      %p68 = scmp.eq.s32.totalorder %s67, 0
      %s70 = sadd.s32 %s69, 1
      %s71 = scalar_select %p68, %s69, %s70
      %p74 = pneg %p68
      %p75 = scmp.eq.s32.totalorder %s12, 1
      %p76 = por %p74, %p75
      %p77 = scmp.ne.s32.totalorder %s69, %s72
      %p78 = scmp.eq.s32.totalorder %s12, 0
      %p79 = por %p77, %p78
      %p80 = scmp.ne.s32.totalorder %s69, %s72
      %p81 = scmp.eq.s32.totalorder %s17, 1
      %p82 = por %p80, %p81
      %p83 = scmp.ne.s32.totalorder %s72, %s73
      %p84 = scmp.eq.s32.totalorder %s17, 0
      %p85 = por %p83, %p84
      %p86 = scmp.ne.s32.totalorder %s72, %s73
      %p87 = scmp.eq.s32.totalorder %s18, 1
      %p88 = por %p86, %p87
      %p90 = scmp.ne.s32.totalorder %s73, %s89
      %p91 = scmp.eq.s32.totalorder %s18, 0
      %p92 = por %p90, %p91
      %p93 = scmp.le.s32.totalorder 1, %s12
      %p94 = scmp.lt.s32.totalorder %s12, 3
      %p95 = pnand %p93, %p94
      %p96 = pneg %p95
      // Predicated region
      $region9: #{tpu_custom_call.1} parent=5 // pred_check
        _
      $region10: #{tpu_custom_call.1} parent=5 // pred_check_branch
        %98 = sbr.rel (%p95) target = $region12
      $region11: #{tpu_custom_call.1} parent=5 // pred_region
        %s99 = ssub.s32 %s12, 1
        // Predicated region
        $region13: #{tpu_custom_call.1} parent=11 // pred_check
          %p100 = pneg %p59
        $region14: #{tpu_custom_call.1} parent=11 // pred_check_branch
          %102 = sbr.rel (%p100) target = $region16
        $region15: #{tpu_custom_call.1} parent=11 // pred_region
          %s104 = ssub.s32 128, 128
          %105 = vsyncadd [#allocation5], %s104
          %s107 = sshll.u32 [#allocation4], 4
          %s108 = int_to_ptr.vmem [resolvable:$true] %s107
          %110 = dma.hbm_to_vmem [thread:$0]  %s1, 128, %s108, [#allocation5]
        $region16: #{tpu_custom_call.1} parent=11 // pred_fallthru
          _
      $region12: #{tpu_custom_call.1} parent=5 // pred_fallthru
        _
      %p111 = scmp.lt.s32.totalorder %s12, 2
      // Predicated region
      $region17: #{tpu_custom_call.1} parent=5 // pred_check
        %p112 = pneg %p111
      $region18: #{tpu_custom_call.1} parent=5 // pred_check_branch
        %114 = sbr.rel (%p112) target = $region20
      $region19: #{tpu_custom_call.1} parent=5 // pred_region
        // Predicated region
        $region21: #{tpu_custom_call.1} parent=19 // pred_check
          %p115 = pneg %p32
        $region22: #{tpu_custom_call.1} parent=19 // pred_check_branch
          %117 = sbr.rel (%p115) target = $region24
        $region23: #{tpu_custom_call.1} parent=19 // pred_region
          %s118 = sand.u32 %s22, 1
          %s119 = scalar_lea.sflag [#allocation3], %s118
          %s120 = sand.u32 %s22, 1
          %s121 = smul.addr %s120, 96
          %s122 = scalar_lea.vmem [#allocation2], %s121
          %s123 = smul.u32 4, %s12
          %s125 = ssub.s32 1536, 1536
          %126 = vsyncadd %s119, %s125
          %s127 = smul.addr %s123, 128
          %s128 = scalar_lea.hbm %s0, %s127
          %s129 = sshll.u32 %s122, 4
          %s130 = int_to_ptr.vmem [resolvable:$true] %s129
          %135 = dma.hbm_to_vmem [thread:$0]  %s128, 1536, %s130, %s119, 1024, 512, 32
        $region24: #{tpu_custom_call.1} parent=19 // pred_fallthru
          _
      $region20: #{tpu_custom_call.1} parent=5 // pred_fallthru
        _
      %p136 = scmp.le.s32.totalorder 1, %s12
      %p137 = scmp.lt.s32.totalorder %s12, 3
      %p138 = pnand %p136, %p137
      %p139 = pneg %p138
      // Predicated region
      $region25: #{tpu_custom_call.1} parent=5 // pred_check
        _
      $region26: #{tpu_custom_call.1} parent=5 // pred_check_branch
        %141 = sbr.rel (%p138) target = $region28
      $region27: #{tpu_custom_call.1} parent=5 // pred_region
        %s142 = ssub.s32 %s12, 1
        %s143 = sand.u32 %s25, 1
        %s144 = scalar_lea.sflag [#allocation3], %s143
        %s145 = sand.u32 %s25, 1
        %s146 = smul.addr %s145, 96
        %s147 = scalar_lea.vmem [#allocation2], %s146
        // Predicated region
        $region29: #{tpu_custom_call.1} parent=27 // pred_check
          %p148 = pneg %p38
        $region30: #{tpu_custom_call.1} parent=27 // pred_check_branch
          %150 = sbr.rel (%p148) target = $region32
        $region31: #{tpu_custom_call.1} parent=27 // pred_region
          %151 = dma.done %s144, 1536
        $region32: #{tpu_custom_call.1} parent=27 // pred_fallthru
          _
        // Predicated region
        $region33: #{tpu_custom_call.1} parent=27 // pred_check
          %p152 = pneg %p59
        $region34: #{tpu_custom_call.1} parent=27 // pred_check_branch
          %154 = sbr.rel (%p152) target = $region36
        $region35: #{tpu_custom_call.1} parent=27 // pred_region
          %155 = dma.done [#allocation5], 128
        $region36: #{tpu_custom_call.1} parent=27 // pred_fallthru
          _
        %s156 = sand.u32 %s25, 1
        %s157 = scalar_lea.sflag [#allocation3], %s156
        %s158 = sand.u32 %s25, 1
        %s159 = smul.addr %s158, 96
        %s160 = scalar_lea.vmem [#allocation2], %s159
        %p161 = pneg %p38
        %p162 = pneg %p35
        %p163 = pneg %p59
        %p164 = pneg %p56
        %p165 = pneg %p85
        %p166 = pneg %p82
        %p167 = scmp.lt.s32.totalorder %s17, 1
        %s168 = scalar_select %p167, %s17, 1
        %s169 = smul.addr %s168, 8
        %s170 = scalar_lea.vmem %s2, %s169
        %s171 = smul.u32 4, %s17
        %p172 = scmp.lt.s32.totalorder %s17, 1
        %s173 = scalar_select %p172, %s17, 1
        %s174 = smul.addr %s173, 8
        %s175 = scalar_lea.vmem %s2, %s174
        %v176 = vld [vmem:[#allocation4] sm:$0xff]
        %v177 = vld [vmem:[%s147] sm:$0xff]
        %v178 = vld [vmem:[%s147 + $0x8] sm:$0xff]
        %v179 = vld [vmem:[%s147 + $0x10] sm:$0xff]
        %v180 = vld [vmem:[%s147 + $0x18] sm:$0xff]
        %v181 = vld [vmem:[%s147 + $0x20] sm:$0xff]
        %v182 = vld [vmem:[%s147 + $0x28] sm:$0xff]
        %v183 = vld [vmem:[%s147 + $0x30] sm:$0xff]
        %v184 = vld [vmem:[%s147 + $0x38] sm:$0xff]
        %v185 = vld [vmem:[%s147 + $0x40] sm:$0xff]
        %v186 = vld [vmem:[%s147 + $0x48] sm:$0xff]
        %v187 = vld [vmem:[%s147 + $0x50] sm:$0xff]
        %v188 = vld [vmem:[%s147 + $0x58] sm:$0xff]
        %vm189 = vcmask 195584
        %v191 = vsel %vm189, %v176, 0
        %193 = vmatprep.subr.mxu0 %v178
        %194 = vmatpush1.msra.mxu0 %v177
        %195 = vmatprep.subr.mxu0 %v182
        %196 = vmatpush1.msra.mxu0 %v181
        %197 = vmatprep.subr.mxu0 %v186
        %198 = vmatpush1.msra.mxu0 %v185
        %199 = vmatprep.subr.mxu0 0.0
        %200 = vmatpush1.msra.mxu0 0.0
        %201 = vmatprep.subr.mxu0 0.0
        %202 = vmatpush1.msra.mxu0 0.0
        %203 = vmatprep.subr.mxu0 0.0
        %204 = vmatpush1.msra.mxu0 0.0
        %205 = vmatprep.subr.mxu0 0.0
        %206 = vmatpush1.msra.mxu0 0.0
        %207 = vmatprep.subr.mxu0 0.0
        %208 = vmatpush1.msra.mxu0 0.0
        %209 = vmatprep.subr.mxu0 0.0
        %210 = vmatpush1.msra.mxu0 0.0
        %211 = vmatprep.subr.mxu0 0.0
        %212 = vmatpush1.msra.mxu0 0.0
        %213 = vmatprep.subr.mxu0 0.0
        %214 = vmatpush1.msra.mxu0 0.0
        %215 = vmatprep.subr.mxu0 0.0
        %216 = vmatpush1.msra.mxu0 0.0
        %217 = vmatprep.subr.mxu0 0.0
        %218 = vmatpush1.msra.mxu0 0.0
        %219 = vmatprep.subr.mxu0 0.0
        %220 = vmatpush1.msra.mxu0 0.0
        %221 = vmatprep.subr.mxu0 0.0
        %222 = vmatpush1.msra.mxu0 0.0
        %223 = vmatprep.subr.mxu0 0.0
        %224 = vmatpush1.msra.mxu0 0.0
        %225 = vmatprep.subr.mxu0 0.0
        %226 = vmatpush1.msra.mxu0 0.0
        %227 = vmatprep.subr.mxu0 0.0
        %228 = vmatpush1.msra.mxu0 0.0
        %229 = vmatprep.subr.mxu0 0.0
        %230 = vmatpush1.msra.mxu0 0.0
        %231 = vmatprep.subr.mxu0 0.0
        %232 = vmatpush1.msra.mxu0 0.0
        %233 = vmatprep.subr.mxu0 0.0
        %234 = vmatpush1.msra.mxu0 0.0
        %235 = vmatprep.subr.mxu0 0.0
        %236 = vmatpush1.msra.mxu0 0.0
        %237 = vmatprep.subr.mxu0 0.0
        %238 = vmatpush1.msra.mxu0 0.0
        %239 = vmatprep.subr.mxu0 0.0
        %240 = vmatpush1.msra.mxu0 0.0
        %241 = vmatprep.subr.mxu0 0.0
        %242 = vmatpush1.msra.mxu0 0.0
        %243 = vmatprep.subr.mxu0 0.0
        %244 = vmatpush1.msra.mxu0 0.0
        %245 = vmatprep.subr.mxu0 0.0
        %246 = vmatpush1.msra.mxu0 0.0
        %247 = vmatprep.subr.mxu0 0.0
        %248 = vmatpush1.msra.mxu0 0.0
        %249 = vmatprep.subr.mxu0 0.0
        %250 = vmatpush1.msra.mxu0 0.0
        %251 = vmatprep.subr.mxu0 0.0
        %252 = vmatpush1.msra.mxu0 0.0
        %253 = vmatprep.subr.mxu0 0.0
        %254 = vmatpush1.msra.mxu0 0.0
        %255 = vmatprep.subr.mxu0 0.0
        %256 = vmatpush1.msra.mxu0 0.0
        %257 = vmatprep.mubr.f32.mxu0 0.0
        %258 = vmatmul.mubr.f32.gmra.mrb[0].mxu0 %v191
        %v259 = vpop.f32.mrb[0].mxu0
        %v260 = vadd.f32 0.0, %v259
        %v261 = vpop.f32.mrb[0].mxu0
        %v262 = vadd.f32 0.0, %v261
        %263 = vdwg.mxu0
        %264 = vmatprep.subr.mxu0 %v180
        %265 = vmatpush1.msra.mxu0 %v179
        %266 = vmatprep.subr.mxu0 %v184
        %267 = vmatpush1.msra.mxu0 %v183
        %268 = vmatprep.subr.mxu0 %v188
        %269 = vmatpush1.msra.mxu0 %v187
        %270 = vmatprep.subr.mxu0 0.0
        %271 = vmatpush1.msra.mxu0 0.0
        %272 = vmatprep.subr.mxu0 0.0
        %273 = vmatpush1.msra.mxu0 0.0
        %274 = vmatprep.subr.mxu0 0.0
        %275 = vmatpush1.msra.mxu0 0.0
        %276 = vmatprep.subr.mxu0 0.0
        %277 = vmatpush1.msra.mxu0 0.0
        %278 = vmatprep.subr.mxu0 0.0
        %279 = vmatpush1.msra.mxu0 0.0
        %280 = vmatprep.subr.mxu0 0.0
        %281 = vmatpush1.msra.mxu0 0.0
        %282 = vmatprep.subr.mxu0 0.0
        %283 = vmatpush1.msra.mxu0 0.0
        %284 = vmatprep.subr.mxu0 0.0
        %285 = vmatpush1.msra.mxu0 0.0
        %286 = vmatprep.subr.mxu0 0.0
        %287 = vmatpush1.msra.mxu0 0.0
        %288 = vmatprep.subr.mxu0 0.0
        %289 = vmatpush1.msra.mxu0 0.0
        %290 = vmatprep.subr.mxu0 0.0
        %291 = vmatpush1.msra.mxu0 0.0
        %292 = vmatprep.subr.mxu0 0.0
        %293 = vmatpush1.msra.mxu0 0.0
        %294 = vmatprep.subr.mxu0 0.0
        %295 = vmatpush1.msra.mxu0 0.0
        %296 = vmatprep.subr.mxu0 0.0
        %297 = vmatpush1.msra.mxu0 0.0
        %298 = vmatprep.subr.mxu0 0.0
        %299 = vmatpush1.msra.mxu0 0.0
        %300 = vmatprep.subr.mxu0 0.0
        %301 = vmatpush1.msra.mxu0 0.0
        %302 = vmatprep.subr.mxu0 0.0
        %303 = vmatpush1.msra.mxu0 0.0
        %304 = vmatprep.subr.mxu0 0.0
        %305 = vmatpush1.msra.mxu0 0.0
        %306 = vmatprep.subr.mxu0 0.0
        %307 = vmatpush1.msra.mxu0 0.0
        %308 = vmatprep.subr.mxu0 0.0
        %309 = vmatpush1.msra.mxu0 0.0
        %310 = vmatprep.subr.mxu0 0.0
        %311 = vmatpush1.msra.mxu0 0.0
        %312 = vmatprep.subr.mxu0 0.0
        %313 = vmatpush1.msra.mxu0 0.0
        %314 = vmatprep.subr.mxu0 0.0
        %315 = vmatpush1.msra.mxu0 0.0
        %316 = vmatprep.subr.mxu0 0.0
        %317 = vmatpush1.msra.mxu0 0.0
        %318 = vmatprep.subr.mxu0 0.0
        %319 = vmatpush1.msra.mxu0 0.0
        %320 = vmatprep.subr.mxu0 0.0
        %321 = vmatpush1.msra.mxu0 0.0
        %322 = vmatprep.subr.mxu0 0.0
        %323 = vmatpush1.msra.mxu0 0.0
        %324 = vmatprep.subr.mxu0 0.0
        %325 = vmatpush1.msra.mxu0 0.0
        %326 = vmatprep.subr.mxu0 0.0
        %327 = vmatpush1.msra.mxu0 0.0
        %328 = vmatprep.mubr.f32.mxu0 0.0
        %329 = vmatmul.mubr.f32.gmra.mrb[0].mxu0 %v191
        %v330 = vpop.f32.mrb[0].mxu0
        %v331 = vadd.f32 0.0, %v330
        %v332 = vpop.f32.mrb[0].mxu0
        %v333 = vadd.f32 0.0, %v332
        %334 = vdwg.mxu0
        %s335 = smul.u32 %s17, 512
        %s336 = ssub.s32 998, %s335
        %v337 = vlaneseq
        %v338 = vand.u32 %v337, 127
        %v339 = vadd.s32 %v338, 128
        %v340 = vadd.s32 %v338, 256
        %v341 = vadd.s32 %v338, 384
        %v342 = vstv %s336
        %vm343 = vcmp.lt.s32.totalorder %v338, %v342
        %vm344 = vcmp.lt.s32.totalorder %v339, %v342
        %vm345 = vcmp.lt.s32.totalorder %v340, %v342
        %vm346 = vcmp.lt.s32.totalorder %v341, %v342
        %v347 = vsel %vm343, 1, 0
        %v348 = vsel %vm344, 1, 0
        %v349 = vsel %vm345, 1, 0
        %v350 = vsel %vm346, 1, 0
        %v351 = vcvt.s32.f32 %v347
        %v352 = vcvt.s32.f32 %v348
        %v353 = vcvt.s32.f32 %v349
        %v354 = vcvt.s32.f32 %v350
        %v355 = vmul.f32 %v260, %v351
        %v356 = vmul.f32 %v262, %v352
        %v357 = vmul.f32 %v331, %v353
        %v358 = vmul.f32 %v333, %v354
        %v359 = vadd.f32 %v355, %v356
        %v360 = vadd.f32 %v359, %v357
        %v361 = vadd.f32 %v360, %v358
        %362 = vadd.xlane.f32.xlu0 %v361
        %v363 = vpop.xlane.xlu0 %362
        %v364 = vmul.f32 %v355, %v260
        %v365 = vmul.f32 %v356, %v262
        %v366 = vmul.f32 %v357, %v331
        %v367 = vmul.f32 %v358, %v333
        %v368 = vadd.f32 %v364, %v365
        %v369 = vadd.f32 %v368, %v366
        %v370 = vadd.f32 %v369, %v367
        %371 = vadd.xlane.f32.xlu0 %v370
        %v372 = vpop.xlane.xlu0 %371
        %vm373 = vcmask 7168
        %v374 = vsel %vm373, %v363, %v372
        %vm375 = vcmask 15360
        %376 = vst.msk [vmem:[%s175] sm:$0xff] %vm375, %v374
        %p377 = scmp.lt.s32.totalorder %s17, 1
        %s378 = scalar_select %p377, %s17, 1
        %s379 = smul.addr %s378, 8
        %s380 = scalar_lea.vmem %s2, %s379
        // Predicated region
        $region37: #{tpu_custom_call.1} parent=27 // pred_check
          %p381 = pneg %p82
        $region38: #{tpu_custom_call.1} parent=27 // pred_check_branch
          %383 = sbr.rel (%p381) target = $region40
        $region39: #{tpu_custom_call.1} parent=27 // pred_region
          _
        $region40: #{tpu_custom_call.1} parent=27 // pred_fallthru
          _
      $region28: #{tpu_custom_call.1} parent=5 // pred_fallthru
        _
      %p384 = scmp.le.s32.totalorder 2, %s12
      // Predicated region
      $region41: #{tpu_custom_call.1} parent=5 // pred_check
        %p385 = pneg %p384
      $region42: #{tpu_custom_call.1} parent=5 // pred_check_branch
        %387 = sbr.rel (%p385) target = $region44
      $region43: #{tpu_custom_call.1} parent=5 // pred_region
        %s388 = ssub.s32 %s12, 2
        // Predicated region
        $region45: #{tpu_custom_call.1} parent=43 // pred_check
          %p389 = pneg %p88
        $region46: #{tpu_custom_call.1} parent=43 // pred_check_branch
          %391 = sbr.rel (%p389) target = $region48
        $region47: #{tpu_custom_call.1} parent=43 // pred_region
          %p392 = scmp.lt.s32.totalorder %s18, 1
          %s393 = scalar_select %p392, %s18, 1
          %s394 = smul.addr %s393, 8
          %s395 = scalar_lea.vmem %s2, %s394
        $region48: #{tpu_custom_call.1} parent=43 // pred_fallthru
          _
      $region44: #{tpu_custom_call.1} parent=5 // pred_fallthru
        _
    $region6: #{tpu_custom_call.1} parent=1 // loop_footer
      %s16 = sadd.s32 1, %s12
    $region7: #{tpu_custom_call.1} parent=1 // loop_footer_branch
      %11 = sbr.rel target = $region3
    $region8: #{tpu_custom_call.1} parent=1 // loop_exit
      _
    %396 = vsyncpa [#allocation3], 1
    %s397 = scalar_lea.sflag [#allocation3], 1
    %398 = vsyncpa %s397, 1
    %399 = vsyncpa [#allocation5], 1

</llo_original>
